<compile_context>
chip_gen: v5e
topology: v5e:2x2
jax: 0.10.0
libtpu: 0.0.40
codegen_flags: <defaults>
</compile_context>

<pallas_src>
import functools
import math

import jax
import jax.numpy as jnp
from jax.experimental import pallas as pl
from jax.experimental.pallas import tpu as pltpu


def _pick_q_tile(lq):
    # biggest lane-aligned tile that divides Lq; fall back to the full extent
    for cand in (2048, 1024, 512, 256, 128):
        if lq % cand == 0:
            return cand
    return lq


def _vmem_need_bytes(C, Lk, tq, KQ, V, H, dk):
    """Rough f32 working-set estimate, padded to the (8,128) vreg grid."""
    def t(sub, lane):
        return ((sub + 7) // 8) * 8 * ((lane + 127) // 128) * 128 * 4
    blocks = 2 * (t(C, tq) + t(C, Lk) + t(V, tq))                 # double-buffered I/O
    weights = 2 * (2 * t(KQ, C) + t(V, C) + 2 * t(KQ, 1) + t(V, 1))
    scratch = H * t(Lk, dk) + t(V, Lk)                            # K^T / V carries
    live = t(KQ, Lk) + t(KQ, tq) + 3 * t(Lk, tq)                  # kt/qt + score temps
    return blocks + weights + scratch + live


def _attn_kernel(q_ref, k_ref, wq_ref, bq_ref, wk_ref, bk_ref, wv_ref, bv_ref,
                 o_ref, k_scr, v_scr, *, n_heads, dk, dv, fast):
    cdt = jnp.bfloat16 if fast else jnp.float32

    # ---- hoisted K/V projections: once per batch element (first query tile).
    # The scratch carry across query tiles is why that grid axis is "arbitrary".
    @pl.when(pl.program_id(1) == 0)
    def _():
        xk = k_ref[0]                                                # (C, Lk)
        kt = jnp.dot(wk_ref[...].astype(cdt), xk.astype(cdt),
                     preferred_element_type=jnp.float32) + bk_ref[...]   # (KQ, Lk)
        vt = jnp.dot(wv_ref[...].astype(cdt), xk.astype(cdt),
                     preferred_element_type=jnp.float32) + bv_ref[...]   # (V, Lk)
        v_scr[...] = vt
        for h in range(n_heads):
            # store K per head as (Lk, dk) so the score matmul is plain [M,K]@[K,N]
            k_scr[h] = jnp.transpose(kt[h * dk:(h + 1) * dk, :])

    # ---- query projection, all heads at once (scale pre-folded into Wq/bq)
    xq = q_ref[0]                                                    # (C, TQ)
    qt = jnp.dot(wq_ref[...].astype(cdt), xq.astype(cdt),
                 preferred_element_type=jnp.float32) + bq_ref[...]   # (KQ, TQ)

    # ---- per-head attention (static unrolled loop; H is small)
    for h in range(n_heads):
        qh = qt[h * dk:(h + 1) * dk, :]                              # (dk, TQ)
        s = jnp.dot(k_scr[h].astype(cdt), qh.astype(cdt),
                    preferred_element_type=jnp.float32)              # (Lk, TQ)
        m = jnp.max(s, axis=0, keepdims=True)                        # (1, TQ)
        z = s - m
        if fast:
            e = jnp.exp(z.astype(jnp.bfloat16))                      # bf16 EUP path
            r = jnp.sum(e.astype(jnp.float32), axis=0, keepdims=True)
        else:
            e = jnp.exp(z)
            r = jnp.sum(e, axis=0, keepdims=True)                    # (1, TQ)
        vh = v_scr[h * dv:(h + 1) * dv, :]                           # (dv, Lk)
        o = jnp.dot(vh.astype(cdt), e.astype(cdt),
                    preferred_element_type=jnp.float32)              # (dv, TQ)
        o = o * pl.reciprocal(r, approx=fast)                        # deferred softmax norm
        o_ref[0, h * dv:(h + 1) * dv, :] = o.astype(o_ref.dtype)


def attention_forward(query, key, wq, bq, wk, bk, wv, bv, *, n_heads=1,
                      tau=1.0, fast_math=False):
    """query: (B, C, Lq), key: (B, C, Lk); weights in torch nn.Linear layout
    wq/wk: (key_query_dim, C), wv: (value_dim, C), biases 1-D.
    Returns (B, value_dim, Lq), matching Attention.forward.
    fast_math=True uses bf16 MXU/EUP paths + approx reciprocal (v6e/v7x);
    it trades exact f32 parity for ~3-4x matmul throughput."""
    B, C, Lq = query.shape
    Bk, Ck, Lk = key.shape
    assert (B, C) == (Bk, Ck)
    KQ = wq.shape[0]
    V = wv.shape[0]
    H = n_heads
    assert KQ % H == 0 and V % H == 0
    dk, dv = KQ // H, V // H
    assert H == 1 or (dk % 8 == 0 and dv % 8 == 0), \
        "per-head dims must be sublane (8) aligned when n_heads > 1"

    # fold the 1/(sqrt(dk)*tau) softmax scale into the (tiny) query projection
    scale = 1.0 / (math.sqrt(dk) * tau)
    wq_s = (wq * scale).astype(query.dtype)
    bq_s = (bq * scale).reshape(KQ, 1).astype(query.dtype)
    bk_c = bk.reshape(KQ, 1).astype(query.dtype)
    bv_c = bv.reshape(V, 1).astype(query.dtype)

    tq = _pick_q_tile(Lq)
    grid = (B, Lq // tq)

    try:
        phys_vmem = pltpu.get_tpu_info().vmem_capacity_bytes
    except Exception:
        phys_vmem = 64 * 1024 * 1024          # conservative (v7x per-TC) fallback
    need = _vmem_need_bytes(C, Lk, tq, KQ, V, H, dk)
    vmem_limit = min(max(int(need * 1.5), 32 * 1024 * 1024),
                     int(phys_vmem * 0.85))

    out = pl.pallas_call(
        functools.partial(_attn_kernel, n_heads=H, dk=dk, dv=dv,
                          fast=fast_math),
        out_shape=jax.ShapeDtypeStruct((B, V, Lq), query.dtype),
        grid=grid,
        in_specs=[
            pl.BlockSpec((1, C, tq), lambda b, t: (b, 0, t)),   # query tile
            pl.BlockSpec((1, C, Lk), lambda b, t: (b, 0, 0)),   # full key (same block all t)
            pl.BlockSpec((KQ, C), lambda b, t: (0, 0)),         # Wq (pre-scaled)
            pl.BlockSpec((KQ, 1), lambda b, t: (0, 0)),         # bq (pre-scaled)
            pl.BlockSpec((KQ, C), lambda b, t: (0, 0)),         # Wk
            pl.BlockSpec((KQ, 1), lambda b, t: (0, 0)),         # bk
            pl.BlockSpec((V, C), lambda b, t: (0, 0)),          # Wv
            pl.BlockSpec((V, 1), lambda b, t: (0, 0)),          # bv
        ],
        out_specs=pl.BlockSpec((1, V, tq), lambda b, t: (b, 0, t)),
        scratch_shapes=[
            pltpu.VMEM((H, Lk, dk), jnp.float32),   # per-head K^T carry
            pltpu.VMEM((V, Lk), jnp.float32),       # V carry (all heads)
        ],
        compiler_params=pltpu.CompilerParams(
            # query-tile axis carries the K/V scratch -> must be "arbitrary";
            # batch stays "parallel" (extent >= 2 keeps both v7x TCs busy).
            dimension_semantics=("parallel", "arbitrary"),
            vmem_limit_bytes=vmem_limit),
    )(query, key, wq_s, bq_s, wk, bk_c, wv, bv_c)
    return out


def _attention_ref(query, key, wq, bq, wk, bk, wv, bv, *, n_heads, tau):
    """Pure-JAX transcription of Attention.forward (for verification)."""
    bs, _, lq = query.shape
    lk = key.shape[2]
    dk = wq.shape[0] // n_heads
    dv = wv.shape[0] // n_heads
    q_ = jnp.transpose(query, (0, 2, 1))
    k_ = jnp.transpose(key, (0, 2, 1))
    q = (q_ @ wq.T + bq).reshape(bs, lq, n_heads, dk).transpose(0, 2, 1, 3)
    k = (k_ @ wk.T + bk).reshape(bs, lk, n_heads, dk).transpose(0, 2, 1, 3)
    v = (k_ @ wv.T + bv).reshape(bs, lk, n_heads, dv).transpose(0, 2, 1, 3)
    attn = (q @ jnp.swapaxes(k, 2, 3)) / math.sqrt(dk) / tau
    attn = jax.nn.softmax(attn, axis=-1)
    out = attn @ v
    out = jnp.transpose(out, (0, 2, 1, 3)).reshape(bs, lq, n_heads * dv)
    return jnp.transpose(out, (0, 2, 1))


if __name__ == "__main__":
    key0 = jax.random.PRNGKey(0)
    B, C, Lq, Lk = 2, 32, 16, 16          # batch, in_dim, query len, key len
    KQ, V, H, TAU = 32, 32, 2, 1.0        # key_query_dim, value_dim, n_heads, tau
    ks = jax.random.split(key0, 8)
    query = jax.random.normal(ks[0], (B, C, Lq), dtype=jnp.float32)
    key_in = jax.random.normal(ks[1], (B, C, Lk), dtype=jnp.float32)
    wq = jax.random.normal(ks[2], (KQ, C), dtype=jnp.float32) * 0.1
    bq = jax.random.normal(ks[3], (KQ,), dtype=jnp.float32) * 0.1
    wk = jax.random.normal(ks[4], (KQ, C), dtype=jnp.float32) * 0.1
    bk = jax.random.normal(ks[5], (KQ,), dtype=jnp.float32) * 0.1
    wv = jax.random.normal(ks[6], (V, C), dtype=jnp.float32) * 0.1
    bv = jax.random.normal(ks[7], (V,), dtype=jnp.float32) * 0.1

    fn = jax.jit(functools.partial(attention_forward, n_heads=H, tau=TAU,
                                   fast_math=False))
    out = fn(query, key_in, wq, bq, wk, bk, wv, bv)
    jax.block_until_ready(out)

    ref = _attention_ref(query, key_in, wq, bq, wk, bk, wv, bv,
                         n_heads=H, tau=TAU)
    assert out.shape == (B, V, Lq) and out.dtype == jnp.float32
    err = float(jnp.max(jnp.abs(out - ref)))
    assert jnp.allclose(out, ref, atol=1e-4, rtol=1e-4), f"max abs err {err}"
    print("KERNEL_OK")
</pallas_src>

<mosaic_0001>
module attributes {stable_mosaic.version = 11 : i64} {
  func.func @_attn_kernel(%arg0: i32, %arg1: i32, %arg2: memref<1x32x16xf32, #tpu.memory_space<vmem>>, %arg3: memref<1x32x16xf32, #tpu.memory_space<vmem>>, %arg4: memref<32x32xf32, #tpu.memory_space<vmem>>, %arg5: memref<32x1xf32, #tpu.memory_space<vmem>>, %arg6: memref<32x32xf32, #tpu.memory_space<vmem>>, %arg7: memref<32x1xf32, #tpu.memory_space<vmem>>, %arg8: memref<32x32xf32, #tpu.memory_space<vmem>>, %arg9: memref<32x1xf32, #tpu.memory_space<vmem>>, %arg10: memref<1x32x16xf32, #tpu.memory_space<vmem>>, %arg11: memref<2x16x16xf32, #tpu.memory_space<vmem>>, %arg12: memref<32x16xf32, #tpu.memory_space<vmem>>) attributes {dimension_semantics = [#tpu.dimension_semantics<parallel>, #tpu.dimension_semantics<arbitrary>], iteration_bounds = array<i64: 2, 1>, scalar_prefetch = 0 : i64, scratch_operands = 2 : i64, tpu.core_type = #tpu.core_type<tc>, window_params = [{transform_indices = @transform_0, window_bounds = array<i64: 1, 32, 16>}, {transform_indices = @transform_1, window_bounds = array<i64: 1, 32, 16>}, {pipeline_mode = #tpu.pipeline_mode<synchronous>, transform_indices = @transform_2, window_bounds = array<i64: 32, 32>}, {pipeline_mode = #tpu.pipeline_mode<synchronous>, transform_indices = @transform_3, window_bounds = array<i64: 32, 1>}, {pipeline_mode = #tpu.pipeline_mode<synchronous>, transform_indices = @transform_4, window_bounds = array<i64: 32, 32>}, {pipeline_mode = #tpu.pipeline_mode<synchronous>, transform_indices = @transform_5, window_bounds = array<i64: 32, 1>}, {pipeline_mode = #tpu.pipeline_mode<synchronous>, transform_indices = @transform_6, window_bounds = array<i64: 32, 32>}, {pipeline_mode = #tpu.pipeline_mode<synchronous>, transform_indices = @transform_7, window_bounds = array<i64: 32, 1>}, {transform_indices = @transform_8, window_bounds = array<i64: 1, 32, 16>}]} {
    %c0_i32 = arith.constant 0 : i32
    %0 = arith.cmpi eq, %arg1, %c0_i32 : i32
    %1 = arith.extui %0 : i1 to i32
    %c0_i32_0 = arith.constant 0 : i32
    %2 = arith.cmpi ne, %1, %c0_i32_0 : i32
    scf.if %2 {
      %c0_29 = arith.constant 0 : index
      %c0_30 = arith.constant 0 : index
      %c0_31 = arith.constant 0 : index
      %48 = vector.load %arg3[%c0_29, %c0_30, %c0_31] : memref<1x32x16xf32, #tpu.memory_space<vmem>>, vector<1x32x16xf32>
      %49 = vector.shape_cast %48 : vector<1x32x16xf32> to vector<32x16xf32>
      %c0_32 = arith.constant 0 : index
      %c0_33 = arith.constant 0 : index
      %50 = vector.load %arg6[%c0_32, %c0_33] : memref<32x32xf32, #tpu.memory_space<vmem>>, vector<32x32xf32>
      %cst_34 = arith.constant dense<0.000000e+00> : vector<32x16xf32>
      %51 = tpu.matmul %50, %49, %cst_34 {dimension_numbers = #tpu.dot_dimension_numbers<[1], [0], [0], [1], [0, 0, 1, 1], [], []>} : vector<32x32xf32>, vector<32x16xf32>, vector<32x16xf32> -> vector<32x16xf32>
      %c0_35 = arith.constant 0 : index
      %c0_36 = arith.constant 0 : index
      %52 = vector.load %arg7[%c0_35, %c0_36] : memref<32x1xf32, #tpu.memory_space<vmem>>, vector<32x1xf32>
      %53 = vector.broadcast %52 : vector<32x1xf32> to vector<32x16xf32>
      %54 = arith.addf %51, %53 : vector<32x16xf32>
      %c0_37 = arith.constant 0 : index
      %c0_38 = arith.constant 0 : index
      %55 = vector.load %arg8[%c0_37, %c0_38] : memref<32x32xf32, #tpu.memory_space<vmem>>, vector<32x32xf32>
      %cst_39 = arith.constant dense<0.000000e+00> : vector<32x16xf32>
      %56 = tpu.matmul %55, %49, %cst_39 {dimension_numbers = #tpu.dot_dimension_numbers<[1], [0], [0], [1], [0, 0, 1, 1], [], []>} : vector<32x32xf32>, vector<32x16xf32>, vector<32x16xf32> -> vector<32x16xf32>
      %c0_40 = arith.constant 0 : index
      %c0_41 = arith.constant 0 : index
      %57 = vector.load %arg9[%c0_40, %c0_41] : memref<32x1xf32, #tpu.memory_space<vmem>>, vector<32x1xf32>
      %58 = vector.broadcast %57 : vector<32x1xf32> to vector<32x16xf32>
      %59 = arith.addf %56, %58 : vector<32x16xf32>
      %c0_42 = arith.constant 0 : index
      %c0_43 = arith.constant 0 : index
      %60 = vector.load %arg12[%c0_42, %c0_43] : memref<32x16xf32, #tpu.memory_space<vmem>>, vector<32x16xf32>
      tpu.vector_store %arg12[%c0_42, %c0_43], %59 {strides = array<i32>} : memref<32x16xf32, #tpu.memory_space<vmem>>, vector<32x16xf32>,
      %61 = vector.extract_strided_slice %54 {offsets = [0, 0], sizes = [16, 16], strides = [1, 1]} : vector<32x16xf32> to vector<16x16xf32>
      %62 = tpu.transpose %61, [1, 0] : vector<16x16xf32> -> vector<16x16xf32>
      %c0_44 = arith.constant 0 : index
      %c0_45 = arith.constant 0 : index
      %c0_46 = arith.constant 0 : index
      %63 = vector.load %arg11[%c0_44, %c0_45, %c0_46] : memref<2x16x16xf32, #tpu.memory_space<vmem>>, vector<1x16x16xf32>
      %64 = vector.shape_cast %63 : vector<1x16x16xf32> to vector<16x16xf32>
      %65 = vector.shape_cast %62 : vector<16x16xf32> to vector<1x16x16xf32>
      tpu.vector_store %arg11[%c0_44, %c0_45, %c0_46], %65 {strides = array<i32>} : memref<2x16x16xf32, #tpu.memory_space<vmem>>, vector<1x16x16xf32>,
      %66 = vector.extract_strided_slice %54 {offsets = [16, 0], sizes = [16, 16], strides = [1, 1]} : vector<32x16xf32> to vector<16x16xf32>
      %67 = tpu.transpose %66, [1, 0] : vector<16x16xf32> -> vector<16x16xf32>
      %c1_47 = arith.constant 1 : index
      %c0_48 = arith.constant 0 : index
      %c0_49 = arith.constant 0 : index
      %68 = vector.load %arg11[%c1_47, %c0_48, %c0_49] : memref<2x16x16xf32, #tpu.memory_space<vmem>>, vector<1x16x16xf32>
      %69 = vector.shape_cast %68 : vector<1x16x16xf32> to vector<16x16xf32>
      %70 = vector.shape_cast %67 : vector<16x16xf32> to vector<1x16x16xf32>
      tpu.vector_store %arg11[%c1_47, %c0_48, %c0_49], %70 {strides = array<i32>} : memref<2x16x16xf32, #tpu.memory_space<vmem>>, vector<1x16x16xf32>,
    } else {
    }
    %c0 = arith.constant 0 : index
    %c0_1 = arith.constant 0 : index
    %c0_2 = arith.constant 0 : index
    %3 = vector.load %arg2[%c0, %c0_1, %c0_2] : memref<1x32x16xf32, #tpu.memory_space<vmem>>, vector<1x32x16xf32>
    %4 = vector.shape_cast %3 : vector<1x32x16xf32> to vector<32x16xf32>
    %c0_3 = arith.constant 0 : index
    %c0_4 = arith.constant 0 : index
    %5 = vector.load %arg4[%c0_3, %c0_4] : memref<32x32xf32, #tpu.memory_space<vmem>>, vector<32x32xf32>
    %cst = arith.constant dense<0.000000e+00> : vector<32x16xf32>
    %6 = tpu.matmul %5, %4, %cst {dimension_numbers = #tpu.dot_dimension_numbers<[1], [0], [0], [1], [0, 0, 1, 1], [], []>} : vector<32x32xf32>, vector<32x16xf32>, vector<32x16xf32> -> vector<32x16xf32>
    %c0_5 = arith.constant 0 : index
    %c0_6 = arith.constant 0 : index
    %7 = vector.load %arg5[%c0_5, %c0_6] : memref<32x1xf32, #tpu.memory_space<vmem>>, vector<32x1xf32>
    %8 = vector.broadcast %7 : vector<32x1xf32> to vector<32x16xf32>
    %9 = arith.addf %6, %8 : vector<32x16xf32>
    %10 = vector.extract_strided_slice %9 {offsets = [0, 0], sizes = [16, 16], strides = [1, 1]} : vector<32x16xf32> to vector<16x16xf32>
    %c0_7 = arith.constant 0 : index
    %c0_8 = arith.constant 0 : index
    %c0_9 = arith.constant 0 : index
    %11 = vector.load %arg11[%c0_7, %c0_8, %c0_9] : memref<2x16x16xf32, #tpu.memory_space<vmem>>, vector<1x16x16xf32>
    %12 = vector.shape_cast %11 : vector<1x16x16xf32> to vector<16x16xf32>
    %cst_10 = arith.constant dense<0.000000e+00> : vector<16x16xf32>
    %13 = tpu.matmul %12, %10, %cst_10 {dimension_numbers = #tpu.dot_dimension_numbers<[1], [0], [0], [1], [0, 0, 1, 1], [], []>} : vector<16x16xf32>, vector<16x16xf32>, vector<16x16xf32> -> vector<16x16xf32>
    %cst_11 = arith.constant dense<0xFF800000> : vector<16xf32>
    %14 = vector.multi_reduction <maximumf>, %13, %cst_11 [0] : vector<16x16xf32> to vector<16xf32>
    %15 = vector.shape_cast %14 : vector<16xf32> to vector<1x16xf32>
    %16 = vector.broadcast %15 : vector<1x16xf32> to vector<16x16xf32>
    %17 = arith.subf %13, %16 : vector<16x16xf32>
    %18 = math.exp %17 : vector<16x16xf32>
    %cst_12 = arith.constant dense<0.000000e+00> : vector<16xf32>
    %19 = vector.multi_reduction <add>, %18, %cst_12 [0] : vector<16x16xf32> to vector<16xf32>
    %20 = vector.shape_cast %19 : vector<16xf32> to vector<1x16xf32>
    %c0_13 = arith.constant 0 : index
    %c0_14 = arith.constant 0 : index
    %21 = vector.load %arg12[%c0_13, %c0_14] : memref<32x16xf32, #tpu.memory_space<vmem>>, vector<16x16xf32>
    %cst_15 = arith.constant dense<0.000000e+00> : vector<16x16xf32>
    %22 = tpu.matmul %21, %18, %cst_15 {dimension_numbers = #tpu.dot_dimension_numbers<[1], [0], [0], [1], [0, 0, 1, 1], [], []>} : vector<16x16xf32>, vector<16x16xf32>, vector<16x16xf32> -> vector<16x16xf32>
    %23 = tpu.reciprocal %20 : vector<1x16xf32> -> vector<1x16xf32>
    %24 = vector.broadcast %23 : vector<1x16xf32> to vector<16x16xf32>
    %25 = arith.mulf %22, %24 : vector<16x16xf32>
    %c0_16 = arith.constant 0 : index
    %c0_17 = arith.constant 0 : index
    %c0_18 = arith.constant 0 : index
    %26 = vector.load %arg10[%c0_16, %c0_17, %c0_18] : memref<1x32x16xf32, #tpu.memory_space<vmem>>, vector<1x16x16xf32>
    %27 = vector.shape_cast %26 : vector<1x16x16xf32> to vector<16x16xf32>
    %28 = vector.shape_cast %25 : vector<16x16xf32> to vector<1x16x16xf32>
    tpu.vector_store %arg10[%c0_16, %c0_17, %c0_18], %28 {strides = array<i32>} : memref<1x32x16xf32, #tpu.memory_space<vmem>>, vector<1x16x16xf32>,
    %29 = vector.extract_strided_slice %9 {offsets = [16, 0], sizes = [16, 16], strides = [1, 1]} : vector<32x16xf32> to vector<16x16xf32>
    %c1 = arith.constant 1 : index
    %c0_19 = arith.constant 0 : index
    %c0_20 = arith.constant 0 : index
    %30 = vector.load %arg11[%c1, %c0_19, %c0_20] : memref<2x16x16xf32, #tpu.memory_space<vmem>>, vector<1x16x16xf32>
    %31 = vector.shape_cast %30 : vector<1x16x16xf32> to vector<16x16xf32>
    %cst_21 = arith.constant dense<0.000000e+00> : vector<16x16xf32>
    %32 = tpu.matmul %31, %29, %cst_21 {dimension_numbers = #tpu.dot_dimension_numbers<[1], [0], [0], [1], [0, 0, 1, 1], [], []>} : vector<16x16xf32>, vector<16x16xf32>, vector<16x16xf32> -> vector<16x16xf32>
    %cst_22 = arith.constant dense<0xFF800000> : vector<16xf32>
    %33 = vector.multi_reduction <maximumf>, %32, %cst_22 [0] : vector<16x16xf32> to vector<16xf32>
    %34 = vector.shape_cast %33 : vector<16xf32> to vector<1x16xf32>
    %35 = vector.broadcast %34 : vector<1x16xf32> to vector<16x16xf32>
    %36 = arith.subf %32, %35 : vector<16x16xf32>
    %37 = math.exp %36 : vector<16x16xf32>
    %cst_23 = arith.constant dense<0.000000e+00> : vector<16xf32>
    %38 = vector.multi_reduction <add>, %37, %cst_23 [0] : vector<16x16xf32> to vector<16xf32>
    %39 = vector.shape_cast %38 : vector<16xf32> to vector<1x16xf32>
    %c16 = arith.constant 16 : index
    %c0_24 = arith.constant 0 : index
    %40 = vector.load %arg12[%c16, %c0_24] : memref<32x16xf32, #tpu.memory_space<vmem>>, vector<16x16xf32>
    %cst_25 = arith.constant dense<0.000000e+00> : vector<16x16xf32>
    %41 = tpu.matmul %40, %37, %cst_25 {dimension_numbers = #tpu.dot_dimension_numbers<[1], [0], [0], [1], [0, 0, 1, 1], [], []>} : vector<16x16xf32>, vector<16x16xf32>, vector<16x16xf32> -> vector<16x16xf32>
    %42 = tpu.reciprocal %39 : vector<1x16xf32> -> vector<1x16xf32>
    %43 = vector.broadcast %42 : vector<1x16xf32> to vector<16x16xf32>
    %44 = arith.mulf %41, %43 : vector<16x16xf32>
    %c0_26 = arith.constant 0 : index
    %c16_27 = arith.constant 16 : index
    %c0_28 = arith.constant 0 : index
    %45 = vector.load %arg10[%c0_26, %c16_27, %c0_28] : memref<1x32x16xf32, #tpu.memory_space<vmem>>, vector<1x16x16xf32>
    %46 = vector.shape_cast %45 : vector<1x16x16xf32> to vector<16x16xf32>
    %47 = vector.shape_cast %44 : vector<16x16xf32> to vector<1x16x16xf32>
    tpu.vector_store %arg10[%c0_26, %c16_27, %c0_28], %47 {strides = array<i32>} : memref<1x32x16xf32, #tpu.memory_space<vmem>>, vector<1x16x16xf32>,
    return
  }
  func.func @transform_0(%arg0: i32, %arg1: i32) -> (i32, i32, i32) {
    %c0_i32 = arith.constant 0 : i32
    %c0_i32_0 = arith.constant 0 : i32
    return %arg0, %c0_i32, %arg1 : i32, i32, i32
  }
  func.func @transform_1(%arg0: i32, %arg1: i32) -> (i32, i32, i32) {
    %c0_i32 = arith.constant 0 : i32
    %c0_i32_0 = arith.constant 0 : i32
    %c0_i32_1 = arith.constant 0 : i32
    return %arg0, %c0_i32, %c0_i32_0 : i32, i32, i32
  }
  func.func @transform_2(%arg0: i32, %arg1: i32) -> (i32, i32) {
    %c0_i32 = arith.constant 0 : i32
    %c0_i32_0 = arith.constant 0 : i32
    %c0_i32_1 = arith.constant 0 : i32
    return %c0_i32, %c0_i32_0 : i32, i32
  }
  func.func @transform_3(%arg0: i32, %arg1: i32) -> (i32, i32) {
    %c0_i32 = arith.constant 0 : i32
    %c0_i32_0 = arith.constant 0 : i32
    %c0_i32_1 = arith.constant 0 : i32
    return %c0_i32, %c0_i32_0 : i32, i32
  }
  func.func @transform_4(%arg0: i32, %arg1: i32) -> (i32, i32) {
    %c0_i32 = arith.constant 0 : i32
    %c0_i32_0 = arith.constant 0 : i32
    %c0_i32_1 = arith.constant 0 : i32
    return %c0_i32, %c0_i32_0 : i32, i32
  }
  func.func @transform_5(%arg0: i32, %arg1: i32) -> (i32, i32) {
    %c0_i32 = arith.constant 0 : i32
    %c0_i32_0 = arith.constant 0 : i32
    %c0_i32_1 = arith.constant 0 : i32
    return %c0_i32, %c0_i32_0 : i32, i32
  }
  func.func @transform_6(%arg0: i32, %arg1: i32) -> (i32, i32) {
    %c0_i32 = arith.constant 0 : i32
    %c0_i32_0 = arith.constant 0 : i32
    %c0_i32_1 = arith.constant 0 : i32
    return %c0_i32, %c0_i32_0 : i32, i32
  }
  func.func @transform_7(%arg0: i32, %arg1: i32) -> (i32, i32) {
    %c0_i32 = arith.constant 0 : i32
    %c0_i32_0 = arith.constant 0 : i32
    %c0_i32_1 = arith.constant 0 : i32
    return %c0_i32, %c0_i32_0 : i32, i32
  }
  func.func @transform_8(%arg0: i32, %arg1: i32) -> (i32, i32, i32) {
    %c0_i32 = arith.constant 0 : i32
    %c0_i32_0 = arith.constant 0 : i32
    return %arg0, %c0_i32, %arg1 : i32, i32, i32
  }
}

</mosaic_0001>

<llo_original>
// kernel: attention_forward.1
$region0: #{attention_forward.1}
  #allocation0 [shape = 'u32[]', space=smem, size = 0x4, offset = 0x4, fixed_abs, tag = 'smem constant byte address 0x4 - core index']
  #allocation1 [shape = 'u32[72,128]{1,0:T(1,128)}', space=vmem, size = 0x9000, scoped, tag = 'internal scratch']
  #allocation2 [shape = 'f32[2,16,16]{2,1,0:T(8,128)}', space=vmem, size = 0x4000, scoped, tag = 'scratch operand']
  #allocation3 [shape = 'f32[32,16]{1,0:T(8,128)}', space=vmem, size = 0x4000, scoped, tag = 'scratch operand']
  %s0 = inlined_call_operand.vmem [shape: f32[2,32,16], index: 0, kind: input, shape index: {}]
  %s1 = inlined_call_operand.vmem [shape: f32[2,32,16], index: 1, kind: input, shape index: {}]
  %s2 = inlined_call_operand.vmem [shape: f32[32,32], index: 2, kind: input, shape index: {}]
  %s3 = inlined_call_operand.vmem [shape: f32[32,1], index: 3, kind: input, shape index: {}]
  %s4 = inlined_call_operand.vmem [shape: f32[32,32], index: 4, kind: input, shape index: {}]
  %s5 = inlined_call_operand.vmem [shape: f32[32,1], index: 5, kind: input, shape index: {}]
  %s6 = inlined_call_operand.vmem [shape: f32[32,32], index: 6, kind: input, shape index: {}]
  %s7 = inlined_call_operand.vmem [shape: f32[32,1], index: 7, kind: input, shape index: {}]
  %s8 = inlined_call_operand.vmem [shape: f32[2,32,16], index: 8, kind: output, shape index: {}]
  %s9 = sld [smem:[#allocation0]]
  $region69: #{attention_forward.1} parent=0
    _
  %s11 = ssub.s32 1, %s9
  %s12 = scalar_select 0, %s11, %s9
  loop: start=0, step=1, limit=4
  $region2: #{attention_forward.1} parent=0 // loop_pre_header
    _
  $region3: #{attention_forward.1} parent=0 // loop_header
    %s14 = sphi 0, %s18
    %p15 = scmp.ge.s32.totalorder %s14, 4
    %s21 = sphi 0, %s33
    %s22 = sphi 0, %s29
    %s23 = sphi 0, %s21
    %s24 = sphi 0, %s22
    %s25 = sphi 0, %s23
    %s26 = sphi 0, %s24
    %s38 = sphi 0, %s40
    %s41 = sphi 0, %s38
    %s42 = sphi 0, %s41
    %s58 = sphi 0, %s42
    %s64 = sphi 0, %s66
    %s67 = sphi 0, %s64
    %s68 = sphi 0, %s67
    %s84 = sphi 0, %s68
    %s88 = sphi 0, %s88
    %s90 = sphi 0, %s88
    %s91 = sphi 0, %s90
    %s105 = sphi 0, %s91
    %s109 = sphi 0, %s109
    %s111 = sphi 0, %s109
    %s112 = sphi 0, %s111
    %s126 = sphi 0, %s112
    %s130 = sphi 0, %s130
    %s132 = sphi 0, %s130
    %s133 = sphi 0, %s132
    %s147 = sphi 0, %s133
    %s151 = sphi 0, %s151
    %s153 = sphi 0, %s151
    %s154 = sphi 0, %s153
    %s168 = sphi 0, %s154
    %s172 = sphi 0, %s172
    %s174 = sphi 0, %s172
    %s175 = sphi 0, %s174
    %s189 = sphi 0, %s175
    %s193 = sphi 0, %s193
    %s195 = sphi 0, %s193
    %s196 = sphi 0, %s195
    %s210 = sphi 0, %s196
    %s218 = sphi 0, %s220
    %s221 = sphi 0, %s218
    %s222 = sphi 0, %s221
    %s238 = sphi 0, %s222
  $region4: #{attention_forward.1} parent=0 // loop_header_branch
    %17 = sbr.rel (%p15) target = $region8
  $region5: #{attention_forward.1} parent=0 // loop_body
    %s19 = ssub.s32 %s14, 1
    %s20 = ssub.s32 %s14, 2
    %s27 = sadd.s32 1, %s22
    %p28 = scmp.ge.s32.totalorder %s27, 1
    %s29 = scalar_select %p28, 0, %s27
    %s30 = sadd.s32 1, %s21
    %s31 = scalar_select %p28, %s30, %s21
    %p32 = scmp.ge.s32.totalorder %s31, 2
    %s33 = scalar_select %p32, 0, %s31
    %s34 = ssub.s32 %s21, %s33
    %s35 = ssub.s32 %s22, %s29
    %s36 = sor.u32 %s34, %s35
    %p37 = scmp.eq.s32.totalorder %s36, 0
    %s39 = sadd.s32 %s38, 1
    %s40 = scalar_select %p37, %s38, %s39
    %p43 = pneg %p37
    %p44 = scmp.eq.s32.totalorder %s14, 1
    %p45 = por %p43, %p44
    %p46 = scmp.ne.s32.totalorder %s38, %s41
    %p47 = scmp.eq.s32.totalorder %s14, 0
    %p48 = por %p46, %p47
    %p49 = scmp.ne.s32.totalorder %s38, %s41
    %p50 = scmp.eq.s32.totalorder %s19, 1
    %p51 = por %p49, %p50
    %p52 = scmp.ne.s32.totalorder %s41, %s42
    %p53 = scmp.eq.s32.totalorder %s19, 0
    %p54 = por %p52, %p53
    %p55 = scmp.ne.s32.totalorder %s41, %s42
    %p56 = scmp.eq.s32.totalorder %s20, 1
    %p57 = por %p55, %p56
    %p59 = scmp.ne.s32.totalorder %s42, %s58
    %p60 = scmp.eq.s32.totalorder %s20, 0
    %p61 = por %p59, %p60
    %s62 = ssub.s32 %s21, %s33
    %p63 = scmp.eq.s32.totalorder %s62, 0
    %s65 = sadd.s32 %s64, 1
    %s66 = scalar_select %p63, %s64, %s65
    %p69 = pneg %p63
    %p70 = scmp.eq.s32.totalorder %s14, 1
    %p71 = por %p69, %p70
    %p72 = scmp.ne.s32.totalorder %s64, %s67
    %p73 = scmp.eq.s32.totalorder %s14, 0
    %p74 = por %p72, %p73
    %p75 = scmp.ne.s32.totalorder %s64, %s67
    %p76 = scmp.eq.s32.totalorder %s19, 1
    %p77 = por %p75, %p76
    %p78 = scmp.ne.s32.totalorder %s67, %s68
    %p79 = scmp.eq.s32.totalorder %s19, 0
    %p80 = por %p78, %p79
    %p81 = scmp.ne.s32.totalorder %s67, %s68
    %p82 = scmp.eq.s32.totalorder %s20, 1
    %p83 = por %p81, %p82
    %p85 = scmp.ne.s32.totalorder %s68, %s84
    %p86 = scmp.eq.s32.totalorder %s20, 0
    %p87 = por %p85, %p86
    %s89 = sadd.s32 %s88, 1
    %p92 = scmp.eq.s32.totalorder %s14, 1
    %p93 = scmp.ne.s32.totalorder %s88, %s90
    %p94 = scmp.eq.s32.totalorder %s14, 0
    %p95 = por %p93, %p94
    %p96 = scmp.ne.s32.totalorder %s88, %s90
    %p97 = scmp.eq.s32.totalorder %s19, 1
    %p98 = por %p96, %p97
    %p99 = scmp.ne.s32.totalorder %s90, %s91
    %p100 = scmp.eq.s32.totalorder %s19, 0
    %p101 = por %p99, %p100
    %p102 = scmp.ne.s32.totalorder %s90, %s91
    %p103 = scmp.eq.s32.totalorder %s20, 1
    %p104 = por %p102, %p103
    %p106 = scmp.ne.s32.totalorder %s91, %s105
    %p107 = scmp.eq.s32.totalorder %s20, 0
    %p108 = por %p106, %p107
    %s110 = sadd.s32 %s109, 1
    %p113 = scmp.eq.s32.totalorder %s14, 1
    %p114 = scmp.ne.s32.totalorder %s109, %s111
    %p115 = scmp.eq.s32.totalorder %s14, 0
    %p116 = por %p114, %p115
    %p117 = scmp.ne.s32.totalorder %s109, %s111
    %p118 = scmp.eq.s32.totalorder %s19, 1
    %p119 = por %p117, %p118
    %p120 = scmp.ne.s32.totalorder %s111, %s112
    %p121 = scmp.eq.s32.totalorder %s19, 0
    %p122 = por %p120, %p121
    %p123 = scmp.ne.s32.totalorder %s111, %s112
    %p124 = scmp.eq.s32.totalorder %s20, 1
    %p125 = por %p123, %p124
    %p127 = scmp.ne.s32.totalorder %s112, %s126
    %p128 = scmp.eq.s32.totalorder %s20, 0
    %p129 = por %p127, %p128
    %s131 = sadd.s32 %s130, 1
    %p134 = scmp.eq.s32.totalorder %s14, 1
    %p135 = scmp.ne.s32.totalorder %s130, %s132
    %p136 = scmp.eq.s32.totalorder %s14, 0
    %p137 = por %p135, %p136
    %p138 = scmp.ne.s32.totalorder %s130, %s132
    %p139 = scmp.eq.s32.totalorder %s19, 1
    %p140 = por %p138, %p139
    %p141 = scmp.ne.s32.totalorder %s132, %s133
    %p142 = scmp.eq.s32.totalorder %s19, 0
    %p143 = por %p141, %p142
    %p144 = scmp.ne.s32.totalorder %s132, %s133
    %p145 = scmp.eq.s32.totalorder %s20, 1
    %p146 = por %p144, %p145
    %p148 = scmp.ne.s32.totalorder %s133, %s147
    %p149 = scmp.eq.s32.totalorder %s20, 0
    %p150 = por %p148, %p149
    %s152 = sadd.s32 %s151, 1
    %p155 = scmp.eq.s32.totalorder %s14, 1
    %p156 = scmp.ne.s32.totalorder %s151, %s153
    %p157 = scmp.eq.s32.totalorder %s14, 0
    %p158 = por %p156, %p157
    %p159 = scmp.ne.s32.totalorder %s151, %s153
    %p160 = scmp.eq.s32.totalorder %s19, 1
    %p161 = por %p159, %p160
    %p162 = scmp.ne.s32.totalorder %s153, %s154
    %p163 = scmp.eq.s32.totalorder %s19, 0
    %p164 = por %p162, %p163
    %p165 = scmp.ne.s32.totalorder %s153, %s154
    %p166 = scmp.eq.s32.totalorder %s20, 1
    %p167 = por %p165, %p166
    %p169 = scmp.ne.s32.totalorder %s154, %s168
    %p170 = scmp.eq.s32.totalorder %s20, 0
    %p171 = por %p169, %p170
    %s173 = sadd.s32 %s172, 1
    %p176 = scmp.eq.s32.totalorder %s14, 1
    %p177 = scmp.ne.s32.totalorder %s172, %s174
    %p178 = scmp.eq.s32.totalorder %s14, 0
    %p179 = por %p177, %p178
    %p180 = scmp.ne.s32.totalorder %s172, %s174
    %p181 = scmp.eq.s32.totalorder %s19, 1
    %p182 = por %p180, %p181
    %p183 = scmp.ne.s32.totalorder %s174, %s175
    %p184 = scmp.eq.s32.totalorder %s19, 0
    %p185 = por %p183, %p184
    %p186 = scmp.ne.s32.totalorder %s174, %s175
    %p187 = scmp.eq.s32.totalorder %s20, 1
    %p188 = por %p186, %p187
    %p190 = scmp.ne.s32.totalorder %s175, %s189
    %p191 = scmp.eq.s32.totalorder %s20, 0
    %p192 = por %p190, %p191
    %s194 = sadd.s32 %s193, 1
    %p197 = scmp.eq.s32.totalorder %s14, 1
    %p198 = scmp.ne.s32.totalorder %s193, %s195
    %p199 = scmp.eq.s32.totalorder %s14, 0
    %p200 = por %p198, %p199
    %p201 = scmp.ne.s32.totalorder %s193, %s195
    %p202 = scmp.eq.s32.totalorder %s19, 1
    %p203 = por %p201, %p202
    %p204 = scmp.ne.s32.totalorder %s195, %s196
    %p205 = scmp.eq.s32.totalorder %s19, 0
    %p206 = por %p204, %p205
    %p207 = scmp.ne.s32.totalorder %s195, %s196
    %p208 = scmp.eq.s32.totalorder %s20, 1
    %p209 = por %p207, %p208
    %p211 = scmp.ne.s32.totalorder %s196, %s210
    %p212 = scmp.eq.s32.totalorder %s20, 0
    %p213 = por %p211, %p212
    %s214 = ssub.s32 %s21, %s33
    %s215 = ssub.s32 %s22, %s29
    %s216 = sor.u32 %s214, %s215
    %p217 = scmp.eq.s32.totalorder %s216, 0
    %s219 = sadd.s32 %s218, 1
    %s220 = scalar_select %p217, %s218, %s219
    %p223 = pneg %p217
    %p224 = scmp.eq.s32.totalorder %s14, 1
    %p225 = por %p223, %p224
    %p226 = scmp.ne.s32.totalorder %s218, %s221
    %p227 = scmp.eq.s32.totalorder %s14, 0
    %p228 = por %p226, %p227
    %p229 = scmp.ne.s32.totalorder %s218, %s221
    %p230 = scmp.eq.s32.totalorder %s19, 1
    %p231 = por %p229, %p230
    %p232 = scmp.ne.s32.totalorder %s221, %s222
    %p233 = scmp.eq.s32.totalorder %s19, 0
    %p234 = por %p232, %p233
    %p235 = scmp.ne.s32.totalorder %s221, %s222
    %p236 = scmp.eq.s32.totalorder %s20, 1
    %p237 = por %p235, %p236
    %p239 = scmp.ne.s32.totalorder %s222, %s238
    %p240 = scmp.eq.s32.totalorder %s20, 0
    %p241 = por %p239, %p240
    %p242 = scmp.le.s32.totalorder 1, %s14
    %p243 = scmp.lt.s32.totalorder %s14, 3
    %p244 = pnand %p242, %p243
    %p245 = pneg %p244
    // Predicated region
    $region9: #{attention_forward.1} parent=5 // pred_check
      _
    $region10: #{attention_forward.1} parent=5 // pred_check_branch
      %247 = sbr.rel (%p244) target = $region12
    $region11: #{attention_forward.1} parent=5 // pred_region
      %s248 = ssub.s32 %s14, 1
      // Predicated region
      $region13: #{attention_forward.1} parent=11 // pred_check
        %p249 = pneg %p101
      $region14: #{attention_forward.1} parent=11 // pred_check_branch
        %251 = sbr.rel (%p249) target = $region16
      $region15: #{attention_forward.1} parent=11 // pred_region
        _
      $region16: #{attention_forward.1} parent=11 // pred_fallthru
        _
      // Predicated region
      $region17: #{attention_forward.1} parent=11 // pred_check
        %p252 = pneg %p122
      $region18: #{attention_forward.1} parent=11 // pred_check_branch
        %254 = sbr.rel (%p252) target = $region20
      $region19: #{attention_forward.1} parent=11 // pred_region
        _
      $region20: #{attention_forward.1} parent=11 // pred_fallthru
        _
      // Predicated region
      $region21: #{attention_forward.1} parent=11 // pred_check
        %p255 = pneg %p143
      $region22: #{attention_forward.1} parent=11 // pred_check_branch
        %257 = sbr.rel (%p255) target = $region24
      $region23: #{attention_forward.1} parent=11 // pred_region
        _
      $region24: #{attention_forward.1} parent=11 // pred_fallthru
        _
      // Predicated region
      $region25: #{attention_forward.1} parent=11 // pred_check
        %p258 = pneg %p164
      $region26: #{attention_forward.1} parent=11 // pred_check_branch
        %260 = sbr.rel (%p258) target = $region28
      $region27: #{attention_forward.1} parent=11 // pred_region
        _
      $region28: #{attention_forward.1} parent=11 // pred_fallthru
        _
      // Predicated region
      $region29: #{attention_forward.1} parent=11 // pred_check
        %p261 = pneg %p185
      $region30: #{attention_forward.1} parent=11 // pred_check_branch
        %263 = sbr.rel (%p261) target = $region32
      $region31: #{attention_forward.1} parent=11 // pred_region
        _
      $region32: #{attention_forward.1} parent=11 // pred_fallthru
        _
      // Predicated region
      $region33: #{attention_forward.1} parent=11 // pred_check
        %p264 = pneg %p206
      $region34: #{attention_forward.1} parent=11 // pred_check_branch
        %266 = sbr.rel (%p264) target = $region36
      $region35: #{attention_forward.1} parent=11 // pred_region
        _
      $region36: #{attention_forward.1} parent=11 // pred_fallthru
        _
    $region12: #{attention_forward.1} parent=5 // pred_fallthru
      _
    %p267 = scmp.lt.s32.totalorder %s14, 2
    // Predicated region
    $region37: #{attention_forward.1} parent=5 // pred_check
      %p268 = pneg %p267
    $region38: #{attention_forward.1} parent=5 // pred_check_branch
      %270 = sbr.rel (%p268) target = $region40
    $region39: #{attention_forward.1} parent=5 // pred_region
      // Predicated region
      $region41: #{attention_forward.1} parent=39 // pred_check
        %p271 = pneg %p48
      $region42: #{attention_forward.1} parent=39 // pred_check_branch
        %273 = sbr.rel (%p271) target = $region44
      $region43: #{attention_forward.1} parent=39 // pred_region
        %p274 = scmp.lt.s32.totalorder %s21, 1
        %s275 = scalar_select %p274, %s21, 1
        %p276 = scmp.lt.s32.totalorder %s22, 0
        %s277 = scalar_select %p276, %s22, 0
        %s278 = smul.addr %s275, 4
        %s279 = sadd.s32 %s277, %s278
        %s280 = smul.addr %s279, 8
        %s281 = scalar_lea.vmem %s0, %s280
      $region44: #{attention_forward.1} parent=39 // pred_fallthru
        _
      // Predicated region
      $region45: #{attention_forward.1} parent=39 // pred_check
        %p282 = pneg %p74
      $region46: #{attention_forward.1} parent=39 // pred_check_branch
        %284 = sbr.rel (%p282) target = $region48
      $region47: #{attention_forward.1} parent=39 // pred_region
        %p285 = scmp.lt.s32.totalorder %s21, 1
        %s286 = scalar_select %p285, %s21, 1
        %s287 = smul.addr %s286, 4
        %s288 = smul.addr %s287, 8
        %s289 = scalar_lea.vmem %s1, %s288
      $region48: #{attention_forward.1} parent=39 // pred_fallthru
        _
    $region40: #{attention_forward.1} parent=5 // pred_fallthru
      _
    %p290 = scmp.le.s32.totalorder 1, %s14
    %p291 = scmp.lt.s32.totalorder %s14, 3
    %p292 = pnand %p290, %p291
    %p293 = pneg %p292
    // Predicated region
    $region49: #{attention_forward.1} parent=5 // pred_check
      _
    $region50: #{attention_forward.1} parent=5 // pred_check_branch
      %295 = sbr.rel (%p292) target = $region52
    $region51: #{attention_forward.1} parent=5 // pred_region
      %s296 = ssub.s32 %s14, 1
      %p297 = scmp.lt.s32.totalorder %s23, 1
      %s298 = scalar_select %p297, %s23, 1
      %p299 = scmp.lt.s32.totalorder %s24, 0
      %s300 = scalar_select %p299, %s24, 0
      %s301 = smul.addr %s298, 4
      %s302 = sadd.s32 %s300, %s301
      %s303 = smul.addr %s302, 8
      %s304 = scalar_lea.vmem %s0, %s303
      %p305 = pneg %p54
      %p306 = pneg %p51
      %p307 = scmp.lt.s32.totalorder %s23, 1
      %s308 = scalar_select %p307, %s23, 1
      %s309 = smul.addr %s308, 4
      %s310 = smul.addr %s309, 8
      %s311 = scalar_lea.vmem %s1, %s310
      %p312 = pneg %p80
      %p313 = pneg %p77
      %p314 = pneg %p101
      %p315 = pneg %p98
      %p316 = pneg %p122
      %p317 = pneg %p119
      %p318 = pneg %p143
      %p319 = pneg %p140
      %p320 = pneg %p164
      %p321 = pneg %p161
      %p322 = pneg %p185
      %p323 = pneg %p182
      %p324 = pneg %p206
      %p325 = pneg %p203
      %p326 = pneg %p234
      %p327 = pneg %p231
      %p328 = scmp.lt.s32.totalorder %s23, 1
      %s329 = scalar_select %p328, %s23, 1
      %p330 = scmp.lt.s32.totalorder %s24, 0
      %s331 = scalar_select %p330, %s24, 0
      %s332 = smul.addr %s329, 4
      %s333 = sadd.s32 %s331, %s332
      %s334 = smul.addr %s333, 8
      %s335 = scalar_lea.vmem %s8, %s334
      %p336 = scmp.lt.s32.totalorder %s23, 1
      %s337 = scalar_select %p336, %s23, 1
      %p338 = scmp.lt.s32.totalorder %s24, 0
      %s339 = scalar_select %p338, %s24, 0
      %s340 = smul.addr %s337, 4
      %s341 = sadd.s32 %s339, %s340
      %s342 = smul.addr %s341, 8
      %s343 = scalar_lea.vmem %s0, %s342
      %p344 = scmp.lt.s32.totalorder %s23, 1
      %s345 = scalar_select %p344, %s23, 1
      %s346 = smul.addr %s345, 4
      %s347 = smul.addr %s346, 8
      %s348 = scalar_lea.vmem %s1, %s347
      %p349 = scmp.lt.s32.totalorder %s23, 1
      %s350 = scalar_select %p349, %s23, 1
      %p351 = scmp.lt.s32.totalorder %s24, 0
      %s352 = scalar_select %p351, %s24, 0
      %s353 = smul.addr %s350, 4
      %s354 = sadd.s32 %s352, %s353
      %s355 = smul.addr %s354, 8
      %s356 = scalar_lea.vmem %s8, %s355
      %p357 = scmp.eq.s32.totalorder %s24, 0
      // Predicated region
      $region53: #{attention_forward.1} parent=51 // pred_check
        %p358 = pneg %p357
      $region54: #{attention_forward.1} parent=51 // pred_check_branch
        %360 = sbr.rel (%p358) target = $region56
      $region55: #{attention_forward.1} parent=51 // pred_region
        %v361 = vld [vmem:[%s348] sm:$0xff]
        %v362 = vld [vmem:[%s348 + $0x8] sm:$0xff]
        %v363 = vld [vmem:[%s348 + $0x10] sm:$0xff]
        %v364 = vld [vmem:[%s348 + $0x18] sm:$0xff]
        %v365 = vld [vmem:[%s4] sm:$0xff]
        %v366 = vld [vmem:[%s4 + $0x8] sm:$0xff]
        %v367 = vld [vmem:[%s4 + $0x10] sm:$0xff]
        %v368 = vld [vmem:[%s4 + $0x18] sm:$0xff]
        %v369 = vld [vmem:[%s5] sm:$0xff]
        %v370 = vld [vmem:[%s5 + $0x8] sm:$0xff]
        %v371 = vld [vmem:[%s5 + $0x10] sm:$0xff]
        %v372 = vld [vmem:[%s5 + $0x18] sm:$0xff]
        %374 = vset.pattern.permute.xlu0 0
        %375 = vperm.xlu0 %374, %v369
        %v376 = vpop.permute.xlu0 %375
        %379 = vset.pattern.permute.xlu0 0
        %380 = vperm.xlu0 %379, %v370
        %v381 = vpop.permute.xlu0 %380
        %384 = vset.pattern.permute.xlu0 0
        %385 = vperm.xlu0 %384, %v371
        %v386 = vpop.permute.xlu0 %385
        %389 = vset.pattern.permute.xlu0 0
        %390 = vperm.xlu0 %389, %v372
        %v391 = vpop.permute.xlu0 %390
        %vm393 = vcmask 261120
        %v395 = vsel %vm393, %v365, 0
        %v398 = vsel %vm393, %v366, 0
        %v401 = vsel %vm393, %v367, 0
        %v404 = vsel %vm393, %v368, 0
        %406 = vmatpush.msra.mxu0 0.0
        %407 = vmatpush.msra.mxu0 0.0
        %408 = vmatpush.msra.mxu0 0.0
        %409 = vmatpush.msra.mxu0 0.0
        %410 = vmatpush.msra.mxu0 0.0
        %411 = vmatpush.msra.mxu0 0.0
        %412 = vmatpush.msra.mxu0 0.0
        %413 = vmatpush.msra.mxu0 0.0
        %414 = vmatpush.msra.mxu0 0.0
        %415 = vmatpush.msra.mxu0 0.0
        %416 = vmatpush.msra.mxu0 0.0
        %417 = vmatpush.msra.mxu0 0.0
        %418 = vmatpush.msra.mxu0 %v364
        %419 = vmatpush.msra.mxu0 %v363
        %420 = vmatpush.msra.mxu0 %v362
        %421 = vmatpush.msra.mxu0 %v361
        %422 = vmatmul.f32.gmra.mxu0 %v395
        %v423 = vpop.f32.mrf.mxu0
        %v424 = vadd.f32 %v376, %v423
        %425 = vmatmul.f32.gmra.mxu0 %v398
        %v426 = vpop.f32.mrf.mxu0
        %v427 = vadd.f32 %v381, %v426
        %428 = vmatmul.f32.gmra.mxu0 %v401
        %v429 = vpop.f32.mrf.mxu0
        %v430 = vadd.f32 %v386, %v429
        %431 = vmatmul.f32.gmra.mxu0 %v404
        %v432 = vpop.f32.mrf.mxu0
        %v433 = vadd.f32 %v391, %v432
        %434 = vdwg.mxu0
        %v435 = vld [vmem:[%s6] sm:$0xff]
        %v436 = vld [vmem:[%s6 + $0x8] sm:$0xff]
        %v437 = vld [vmem:[%s6 + $0x10] sm:$0xff]
        %v438 = vld [vmem:[%s6 + $0x18] sm:$0xff]
        %v439 = vld [vmem:[%s7] sm:$0xff]
        %v440 = vld [vmem:[%s7 + $0x8] sm:$0xff]
        %v441 = vld [vmem:[%s7 + $0x10] sm:$0xff]
        %v442 = vld [vmem:[%s7 + $0x18] sm:$0xff]
        %444 = vset.pattern.permute.xlu0 0
        %445 = vperm.xlu0 %444, %v439
        %v446 = vpop.permute.xlu0 %445
        %449 = vset.pattern.permute.xlu0 0
        %450 = vperm.xlu0 %449, %v440
        %v451 = vpop.permute.xlu0 %450
        %454 = vset.pattern.permute.xlu0 0
        %455 = vperm.xlu0 %454, %v441
        %v456 = vpop.permute.xlu0 %455
        %459 = vset.pattern.permute.xlu0 0
        %460 = vperm.xlu0 %459, %v442
        %v461 = vpop.permute.xlu0 %460
        %v464 = vsel %vm393, %v435, 0
        %v467 = vsel %vm393, %v436, 0
        %v470 = vsel %vm393, %v437, 0
        %v473 = vsel %vm393, %v438, 0
        %475 = vmatpush.msra.mxu0 0.0
        %476 = vmatpush.msra.mxu0 0.0
        %477 = vmatpush.msra.mxu0 0.0
        %478 = vmatpush.msra.mxu0 0.0
        %479 = vmatpush.msra.mxu0 0.0
        %480 = vmatpush.msra.mxu0 0.0
        %481 = vmatpush.msra.mxu0 0.0
        %482 = vmatpush.msra.mxu0 0.0
        %483 = vmatpush.msra.mxu0 0.0
        %484 = vmatpush.msra.mxu0 0.0
        %485 = vmatpush.msra.mxu0 0.0
        %486 = vmatpush.msra.mxu0 0.0
        %487 = vmatpush.msra.mxu0 %v364
        %488 = vmatpush.msra.mxu0 %v363
        %489 = vmatpush.msra.mxu0 %v362
        %490 = vmatpush.msra.mxu0 %v361
        %491 = vmatmul.f32.gmra.mxu0 %v464
        %v492 = vpop.f32.mrf.mxu0
        %v493 = vadd.f32 %v446, %v492
        %494 = vmatmul.f32.gmra.mxu0 %v467
        %v495 = vpop.f32.mrf.mxu0
        %v496 = vadd.f32 %v451, %v495
        %497 = vmatmul.f32.gmra.mxu0 %v470
        %v498 = vpop.f32.mrf.mxu0
        %v499 = vadd.f32 %v456, %v498
        %500 = vmatmul.f32.gmra.mxu0 %v473
        %v501 = vpop.f32.mrf.mxu0
        %v502 = vadd.f32 %v461, %v501
        %503 = vdwg.mxu0
        %vm504 = vcmask 130048
        %505 = vst.msk [vmem:[#allocation3] sm:$0xff] %vm504, %v493
        %506 = vst.msk [vmem:[#allocation3 + $0x8] sm:$0xff] %vm504, %v496
        %507 = vst.msk [vmem:[#allocation3 + $0x10] sm:$0xff] %vm504, %v499
        %508 = vst.msk [vmem:[#allocation3 + $0x18] sm:$0xff] %vm504, %v502
        %509 = vxpose.xlu0.b32.start [1/16] %v424, 128
        %510 = vxpose.xlu0.b32.cont [2/16] %v427, 128
        %511 = vxpose.xlu0.b32.cont [3/16] 0.0, 128
        %512 = vxpose.xlu0.b32.cont [4/16] 0.0, 128
        %513 = vxpose.xlu0.b32.cont [5/16] 0.0, 128
        %514 = vxpose.xlu0.b32.cont [6/16] 0.0, 128
        %515 = vxpose.xlu0.b32.cont [7/16] 0.0, 128
        %516 = vxpose.xlu0.b32.cont [8/16] 0.0, 128
        %517 = vxpose.xlu0.b32.cont [9/16] 0.0, 128
        %518 = vxpose.xlu0.b32.cont [10/16] 0.0, 128
        %519 = vxpose.xlu0.b32.cont [11/16] 0.0, 128
        %520 = vxpose.xlu0.b32.cont [12/16] 0.0, 128
        %521 = vxpose.xlu0.b32.cont [13/16] 0.0, 128
        %522 = vxpose.xlu0.b32.cont [14/16] 0.0, 128
        %523 = vxpose.xlu0.b32.cont [15/16] 0.0, 128
        %524 = vxpose.xlu0.b32.end [16/16] 0.0, 128
        %v525 = vpop.trf.xlu0
        %v526 = vpop.trf.xlu0
        %v527 = vpop.trf.xlu0
        %v528 = vpop.trf.xlu0
        %v529 = vpop.trf.xlu0
        %v530 = vpop.trf.xlu0
        %v531 = vpop.trf.xlu0
        %v532 = vpop.trf.xlu0
        %v533 = vpop.trf.xlu0
        %v534 = vpop.trf.xlu0
        %v535 = vpop.trf.xlu0
        %v536 = vpop.trf.xlu0
        %v537 = vpop.trf.xlu0
        %v538 = vpop.trf.xlu0
        %v539 = vpop.trf.xlu0
        %v540 = vpop.trf.xlu0
        %541 = vst.msk [vmem:[#allocation2] sm:$0xff] %vm504, %v525
        %542 = vst.msk [vmem:[#allocation2 + $0x8] sm:$0xff] %vm504, %v526
        %543 = vxpose.xlu0.b32.start [1/16] %v430, 128
        %544 = vxpose.xlu0.b32.cont [2/16] %v433, 128
        %545 = vxpose.xlu0.b32.cont [3/16] 0.0, 128
        %546 = vxpose.xlu0.b32.cont [4/16] 0.0, 128
        %547 = vxpose.xlu0.b32.cont [5/16] 0.0, 128
        %548 = vxpose.xlu0.b32.cont [6/16] 0.0, 128
        %549 = vxpose.xlu0.b32.cont [7/16] 0.0, 128
        %550 = vxpose.xlu0.b32.cont [8/16] 0.0, 128
        %551 = vxpose.xlu0.b32.cont [9/16] 0.0, 128
        %552 = vxpose.xlu0.b32.cont [10/16] 0.0, 128
        %553 = vxpose.xlu0.b32.cont [11/16] 0.0, 128
        %554 = vxpose.xlu0.b32.cont [12/16] 0.0, 128
        %555 = vxpose.xlu0.b32.cont [13/16] 0.0, 128
        %556 = vxpose.xlu0.b32.cont [14/16] 0.0, 128
        %557 = vxpose.xlu0.b32.cont [15/16] 0.0, 128
        %558 = vxpose.xlu0.b32.end [16/16] 0.0, 128
        %v559 = vpop.trf.xlu0
        %v560 = vpop.trf.xlu0
        %v561 = vpop.trf.xlu0
        %v562 = vpop.trf.xlu0
        %v563 = vpop.trf.xlu0
        %v564 = vpop.trf.xlu0
        %v565 = vpop.trf.xlu0
        %v566 = vpop.trf.xlu0
        %v567 = vpop.trf.xlu0
        %v568 = vpop.trf.xlu0
        %v569 = vpop.trf.xlu0
        %v570 = vpop.trf.xlu0
        %v571 = vpop.trf.xlu0
        %v572 = vpop.trf.xlu0
        %v573 = vpop.trf.xlu0
        %v574 = vpop.trf.xlu0
        %s575 = scalar_lea.vmem [#allocation2], 16
        %576 = vst.msk [vmem:[%s575] sm:$0xff] %vm504, %v559
        %577 = vst.msk [vmem:[%s575 + $0x8] sm:$0xff] %vm504, %v560
      $region56: #{attention_forward.1} parent=51 // pred_fallthru
        _
      %v578 = vld [vmem:[%s343] sm:$0xff]
      %v579 = vld [vmem:[%s343 + $0x8] sm:$0xff]
      %v580 = vld [vmem:[%s343 + $0x10] sm:$0xff]
      %v581 = vld [vmem:[%s343 + $0x18] sm:$0xff]
      %v582 = vld [vmem:[%s2] sm:$0xff]
      %v583 = vld [vmem:[%s2 + $0x8] sm:$0xff]
      %v584 = vld [vmem:[%s2 + $0x10] sm:$0xff]
      %v585 = vld [vmem:[%s2 + $0x18] sm:$0xff]
      %v586 = vld [vmem:[%s3] sm:$0xff]
      %v587 = vld [vmem:[%s3 + $0x8] sm:$0xff]
      %v588 = vld [vmem:[%s3 + $0x10] sm:$0xff]
      %v589 = vld [vmem:[%s3 + $0x18] sm:$0xff]
      %591 = vset.pattern.permute.xlu0 0
      %592 = vperm.xlu0 %591, %v586
      %v593 = vpop.permute.xlu0 %592
      %596 = vset.pattern.permute.xlu0 0
      %597 = vperm.xlu0 %596, %v587
      %v598 = vpop.permute.xlu0 %597
      %601 = vset.pattern.permute.xlu0 0
      %602 = vperm.xlu0 %601, %v588
      %v603 = vpop.permute.xlu0 %602
      %606 = vset.pattern.permute.xlu0 0
      %607 = vperm.xlu0 %606, %v589
      %v608 = vpop.permute.xlu0 %607
      %vm610 = vcmask 261120
      %v612 = vsel %vm610, %v582, 0
      %v615 = vsel %vm610, %v583, 0
      %v618 = vsel %vm610, %v584, 0
      %v621 = vsel %vm610, %v585, 0
      %623 = vmatpush.msra.mxu0 0.0
      %624 = vmatpush.msra.mxu0 0.0
      %625 = vmatpush.msra.mxu0 0.0
      %626 = vmatpush.msra.mxu0 0.0
      %627 = vmatpush.msra.mxu0 0.0
      %628 = vmatpush.msra.mxu0 0.0
      %629 = vmatpush.msra.mxu0 0.0
      %630 = vmatpush.msra.mxu0 0.0
      %631 = vmatpush.msra.mxu0 0.0
      %632 = vmatpush.msra.mxu0 0.0
      %633 = vmatpush.msra.mxu0 0.0
      %634 = vmatpush.msra.mxu0 0.0
      %635 = vmatpush.msra.mxu0 %v581
      %636 = vmatpush.msra.mxu0 %v580
      %637 = vmatpush.msra.mxu0 %v579
      %638 = vmatpush.msra.mxu0 %v578
      %639 = vmatmul.f32.gmra.mxu0 %v612
      %v640 = vpop.f32.mrf.mxu0
      %v641 = vadd.f32 %v593, %v640
      %642 = vmatmul.f32.gmra.mxu0 %v615
      %v643 = vpop.f32.mrf.mxu0
      %v644 = vadd.f32 %v598, %v643
      %645 = vmatmul.f32.gmra.mxu0 %v618
      %v646 = vpop.f32.mrf.mxu0
      %v647 = vadd.f32 %v603, %v646
      %648 = vmatmul.f32.gmra.mxu0 %v621
      %v649 = vpop.f32.mrf.mxu0
      %v650 = vadd.f32 %v608, %v649
      %651 = vdwg.mxu0
      %v652 = vld [vmem:[#allocation2] sm:$0xff]
      %v653 = vld [vmem:[#allocation2 + $0x8] sm:$0xff]
      %vm654 = vcmask 130048
      %v656 = vsel %vm654, %v652, 0
      %v659 = vsel %vm654, %v653, 0
      %661 = vmatpush.msra.mxu0 0.0
      %662 = vmatpush.msra.mxu0 0.0
      %663 = vmatpush.msra.mxu0 0.0
      %664 = vmatpush.msra.mxu0 0.0
      %665 = vmatpush.msra.mxu0 0.0
      %666 = vmatpush.msra.mxu0 0.0
      %667 = vmatpush.msra.mxu0 0.0
      %668 = vmatpush.msra.mxu0 0.0
      %669 = vmatpush.msra.mxu0 0.0
      %670 = vmatpush.msra.mxu0 0.0
      %671 = vmatpush.msra.mxu0 0.0
      %672 = vmatpush.msra.mxu0 0.0
      %673 = vmatpush.msra.mxu0 0.0
      %674 = vmatpush.msra.mxu0 0.0
      %675 = vmatpush.msra.mxu0 %v644
      %676 = vmatpush.msra.mxu0 %v641
      %677 = vmatmul.f32.gmra.mxu0 %v656
      %v678 = vpop.f32.mrf.mxu0
      %v679 = vadd.f32 0.0, %v678
      %680 = vmatmul.f32.gmra.mxu0 %v659
      %v681 = vpop.f32.mrf.mxu0
      %v682 = vadd.f32 0.0, %v681
      %683 = vdwg.mxu0
      %v684 = vsel %vm654, %v679, -inf
      %v685 = vsel %vm654, %v682, -inf
      %v686 = vmax.f32 %v684, %v685
      %v687 = vrot.slane %v686, 4
      %v688 = vmax.f32 %v686, %v687
      %v689 = vrot.slane %v688, 2
      %v690 = vmax.f32 %v688, %v689
      %v691 = vrot.slane %v690, 1
      %v692 = vmax.f32 %v690, %v691
      %v693 = vsub.f32 %v679, %v692
      %v694 = vsub.f32 %v682, %v692
      %v695 = vmul.f32 %v693, 1.442695
      %v696 = vpow.pop %v695
      %v697 = vmul.f32 %v694, 1.442695
      %v698 = vpow.pop %v697
      %v699 = vsel %vm654, %v696, 0.0
      %v700 = vsel %vm654, %v698, 0.0
      %v701 = vadd.f32 %v699, %v700
      %v702 = vrot.slane %v701, 4
      %v703 = vadd.f32 %v701, %v702
      %v704 = vrot.slane %v703, 2
      %v705 = vadd.f32 %v703, %v704
      %v706 = vrot.slane %v705, 1
      %v707 = vadd.f32 %v705, %v706
      %v708 = vld [vmem:[#allocation3] sm:$0xff]
      %v709 = vld [vmem:[#allocation3 + $0x8] sm:$0xff]
      %v711 = vsel %vm654, %v708, 0
      %v714 = vsel %vm654, %v709, 0
      %716 = vmatpush.msra.mxu0 0.0
      %717 = vmatpush.msra.mxu0 0.0
      %718 = vmatpush.msra.mxu0 0.0
      %719 = vmatpush.msra.mxu0 0.0
      %720 = vmatpush.msra.mxu0 0.0
      %721 = vmatpush.msra.mxu0 0.0
      %722 = vmatpush.msra.mxu0 0.0
      %723 = vmatpush.msra.mxu0 0.0
      %724 = vmatpush.msra.mxu0 0.0
      %725 = vmatpush.msra.mxu0 0.0
      %726 = vmatpush.msra.mxu0 0.0
      %727 = vmatpush.msra.mxu0 0.0
      %728 = vmatpush.msra.mxu0 0.0
      %729 = vmatpush.msra.mxu0 0.0
      %730 = vmatpush.msra.mxu0 %v698
      %731 = vmatpush.msra.mxu0 %v696
      %732 = vmatmul.f32.gmra.mxu0 %v711
      %v733 = vpop.f32.mrf.mxu0
      %v734 = vadd.f32 0.0, %v733
      %735 = vmatmul.f32.gmra.mxu0 %v714
      %v736 = vpop.f32.mrf.mxu0
      %v737 = vadd.f32 0.0, %v736
      %738 = vdwg.mxu0
      %v739 = vrcp.pop %v707
      %v740 = vmul.f32 %v707, %v739
      %v741 = vsub.f32 1.0, %v740
      %v742 = vmul.f32 %v739, %v741
      %v743 = vadd.f32 %v739, %v742
      %vm744 = vweird.f32 %v707
      %vm745 = vweird.f32 %v739
      %vm746 = vmor %vm744, %vm745
      %v747 = vsel %vm746, %v739, %v743
      %v748 = vand.u32 2147483647, %v707
      %vm749 = vcmp.eq.f32.partialorder %v748, 8.507059e+37
      %v750 = vand.u32 %v707, 2147483648
      %v751 = vor.u32 1.1754944e-38, %v750
      %v752 = vsel %vm749, %v751, %v747
      %v753 = vmul.f32 %v734, %v752
      %v754 = vmul.f32 %v737, %v752
      %755 = vst.msk [vmem:[%s356] sm:$0xff] %vm654, %v753
      %756 = vst.msk [vmem:[%s356 + $0x8] sm:$0xff] %vm654, %v754
      %s757 = scalar_lea.vmem [#allocation2], 16
      %v758 = vld [vmem:[%s757] sm:$0xff]
      %v759 = vld [vmem:[%s757 + $0x8] sm:$0xff]
      %v761 = vsel %vm654, %v758, 0
      %v764 = vsel %vm654, %v759, 0
      %766 = vmatpush.msra.mxu0 0.0
      %767 = vmatpush.msra.mxu0 0.0
      %768 = vmatpush.msra.mxu0 0.0
      %769 = vmatpush.msra.mxu0 0.0
      %770 = vmatpush.msra.mxu0 0.0
      %771 = vmatpush.msra.mxu0 0.0
      %772 = vmatpush.msra.mxu0 0.0
      %773 = vmatpush.msra.mxu0 0.0
      %774 = vmatpush.msra.mxu0 0.0
      %775 = vmatpush.msra.mxu0 0.0
      %776 = vmatpush.msra.mxu0 0.0
      %777 = vmatpush.msra.mxu0 0.0
      %778 = vmatpush.msra.mxu0 0.0
      %779 = vmatpush.msra.mxu0 0.0
      %780 = vmatpush.msra.mxu0 %v650
      %781 = vmatpush.msra.mxu0 %v647
      %782 = vmatmul.f32.gmra.mxu0 %v761
      %v783 = vpop.f32.mrf.mxu0
      %v784 = vadd.f32 0.0, %v783
      %785 = vmatmul.f32.gmra.mxu0 %v764
      %v786 = vpop.f32.mrf.mxu0
      %v787 = vadd.f32 0.0, %v786
      %788 = vdwg.mxu0
      %v789 = vsel %vm654, %v784, -inf
      %v790 = vsel %vm654, %v787, -inf
      %v791 = vmax.f32 %v789, %v790
      %v792 = vrot.slane %v791, 4
      %v793 = vmax.f32 %v791, %v792
      %v794 = vrot.slane %v793, 2
      %v795 = vmax.f32 %v793, %v794
      %v796 = vrot.slane %v795, 1
      %v797 = vmax.f32 %v795, %v796
      %v798 = vsub.f32 %v784, %v797
      %v799 = vsub.f32 %v787, %v797
      %v800 = vmul.f32 %v798, 1.442695
      %v801 = vpow.pop %v800
      %v802 = vmul.f32 %v799, 1.442695
      %v803 = vpow.pop %v802
      %v804 = vsel %vm654, %v801, 0.0
      %v805 = vsel %vm654, %v803, 0.0
      %v806 = vadd.f32 %v804, %v805
      %v807 = vrot.slane %v806, 4
      %v808 = vadd.f32 %v806, %v807
      %v809 = vrot.slane %v808, 2
      %v810 = vadd.f32 %v808, %v809
      %v811 = vrot.slane %v810, 1
      %v812 = vadd.f32 %v810, %v811
      %v813 = vld [vmem:[#allocation3 + $0x10] sm:$0xff]
      %v814 = vld [vmem:[#allocation3 + $0x18] sm:$0xff]
      %v816 = vsel %vm654, %v813, 0
      %v819 = vsel %vm654, %v814, 0
      %821 = vmatpush.msra.mxu0 0.0
      %822 = vmatpush.msra.mxu0 0.0
      %823 = vmatpush.msra.mxu0 0.0
      %824 = vmatpush.msra.mxu0 0.0
      %825 = vmatpush.msra.mxu0 0.0
      %826 = vmatpush.msra.mxu0 0.0
      %827 = vmatpush.msra.mxu0 0.0
      %828 = vmatpush.msra.mxu0 0.0
      %829 = vmatpush.msra.mxu0 0.0
      %830 = vmatpush.msra.mxu0 0.0
      %831 = vmatpush.msra.mxu0 0.0
      %832 = vmatpush.msra.mxu0 0.0
      %833 = vmatpush.msra.mxu0 0.0
      %834 = vmatpush.msra.mxu0 0.0
      %835 = vmatpush.msra.mxu0 %v803
      %836 = vmatpush.msra.mxu0 %v801
      %837 = vmatmul.f32.gmra.mxu0 %v816
      %v838 = vpop.f32.mrf.mxu0
      %v839 = vadd.f32 0.0, %v838
      %840 = vmatmul.f32.gmra.mxu0 %v819
      %v841 = vpop.f32.mrf.mxu0
      %v842 = vadd.f32 0.0, %v841
      %843 = vdwg.mxu0
      %v844 = vrcp.pop %v812
      %v845 = vmul.f32 %v812, %v844
      %v846 = vsub.f32 1.0, %v845
      %v847 = vmul.f32 %v844, %v846
      %v848 = vadd.f32 %v844, %v847
      %vm849 = vweird.f32 %v812
      %vm850 = vweird.f32 %v844
      %vm851 = vmor %vm849, %vm850
      %v852 = vsel %vm851, %v844, %v848
      %v853 = vand.u32 2147483647, %v812
      %vm854 = vcmp.eq.f32.partialorder %v853, 8.507059e+37
      %v855 = vand.u32 %v812, 2147483648
      %v856 = vor.u32 1.1754944e-38, %v855
      %v857 = vsel %vm854, %v856, %v852
      %v858 = vmul.f32 %v839, %v857
      %v859 = vmul.f32 %v842, %v857
      %860 = vst.msk [vmem:[%s356 + $0x10] sm:$0xff] %vm654, %v858
      %861 = vst.msk [vmem:[%s356 + $0x18] sm:$0xff] %vm654, %v859
      %p862 = scmp.lt.s32.totalorder %s23, 1
      %s863 = scalar_select %p862, %s23, 1
      %p864 = scmp.lt.s32.totalorder %s24, 0
      %s865 = scalar_select %p864, %s24, 0
      %s866 = smul.addr %s863, 4
      %s867 = sadd.s32 %s865, %s866
      %s868 = smul.addr %s867, 8
      %s869 = scalar_lea.vmem %s8, %s868
      // Predicated region
      $region57: #{attention_forward.1} parent=51 // pred_check
        %p870 = pneg %p231
      $region58: #{attention_forward.1} parent=51 // pred_check_branch
        %872 = sbr.rel (%p870) target = $region60
      $region59: #{attention_forward.1} parent=51 // pred_region
        _
      $region60: #{attention_forward.1} parent=51 // pred_fallthru
        _
    $region52: #{attention_forward.1} parent=5 // pred_fallthru
      _
    %p873 = scmp.le.s32.totalorder 2, %s14
    // Predicated region
    $region61: #{attention_forward.1} parent=5 // pred_check
      %p874 = pneg %p873
    $region62: #{attention_forward.1} parent=5 // pred_check_branch
      %876 = sbr.rel (%p874) target = $region64
    $region63: #{attention_forward.1} parent=5 // pred_region
      %s877 = ssub.s32 %s14, 2
      // Predicated region
      $region65: #{attention_forward.1} parent=63 // pred_check
        %p878 = pneg %p237
      $region66: #{attention_forward.1} parent=63 // pred_check_branch
        %880 = sbr.rel (%p878) target = $region68
      $region67: #{attention_forward.1} parent=63 // pred_region
        %p881 = scmp.lt.s32.totalorder %s25, 1
        %s882 = scalar_select %p881, %s25, 1
        %p883 = scmp.lt.s32.totalorder %s26, 0
        %s884 = scalar_select %p883, %s26, 0
        %s885 = smul.addr %s882, 4
        %s886 = sadd.s32 %s884, %s885
        %s887 = smul.addr %s886, 8
        %s888 = scalar_lea.vmem %s8, %s887
      $region68: #{attention_forward.1} parent=63 // pred_fallthru
        _
    $region64: #{attention_forward.1} parent=5 // pred_fallthru
      _
  $region6: #{attention_forward.1} parent=0 // loop_footer
    %s18 = sadd.s32 1, %s14
  $region7: #{attention_forward.1} parent=0 // loop_footer_branch
    %13 = sbr.rel target = $region3
  $region8: #{attention_forward.1} parent=0 // loop_exit
    _

</llo_original>
